<compile_context>
chip_gen: v7x
topology: tpu7x:2x2x1
jax: 0.10.0
libtpu: 0.0.40
codegen_flags: <defaults>
</compile_context>

<pallas_src>
import jax
import jax.numpy as jnp
import numpy as np
from jax.experimental import pallas as pl
from jax.experimental.pallas import tpu as pltpu

_LANE = 128
_TILE_CAP = 8192  # pixels per grid step; keeps double-buffered tiles well under VMEM limits


def _pick_tile_hw(hw, cap=_TILE_CAP):
    """Largest multiple of 128 that divides hw (capped); fall back to the full extent."""
    if hw % _LANE != 0:
        return hw  # full-extent block is always legal (tiny / odd spatial dims)
    best = _LANE
    c = _LANE
    limit = min(hw, cap)
    while c <= limit:
        if hw % c == 0:
            best = c
        c += _LANE
    return best


def _head_logits(x, w, b):
    """1x1-conv head, channel-major: logits (Ncls, T) from x (Cin, T), w (Ncls, Cin), b (Ncls, 1).

    Unrolled VPU broadcast-FMAs over the small static Cin; avoids wasting the MXU on a K=4
    contraction and keeps the vex slot free on this HBM-bound kernel.
    """
    ncls, cin = w.shape
    acc = b + w[:, 0:1] * x[0:1, :]          # (Ncls,1)*(1,T) broadcasts to (Ncls,T)
    for k in range(1, cin):
        acc = acc + w[:, k:k + 1] * x[k:k + 1, :]
    return acc


def _logits_kernel(x_ref, w_ref, b_ref, logits_ref):
    # x_ref: (Cin, T), w_ref: (Ncls, Cin), b_ref: (Ncls, 1) -> logits_ref: (Ncls, T)
    logits_ref[...] = _head_logits(x_ref[...], w_ref[...], b_ref[...])


def _fused_kernel(x_ref, w_ref, b_ref, lab_ref, logits_ref, loss_ref, nll_acc, cnt_acc):
    # Fused: compute the logits tile, write it out, and accumulate the CE loss in VMEM scratch.
    n, t = pl.program_id(0), pl.program_id(1)

    @pl.when(jnp.logical_and(n == 0, t == 0))
    def _():
        nll_acc[...] = jnp.zeros_like(nll_acc)
        cnt_acc[...] = jnp.zeros_like(cnt_acc)

    logits = _head_logits(x_ref[...], w_ref[...], b_ref[...])       # (Ncls, T) f32
    logits_ref[...] = logits                                        # lane-dense store

    labels = lab_ref[...]                                           # (1, T) i32, lane-dense
    m = jnp.max(logits, axis=0, keepdims=True)                      # (1, T)
    lse = m + jnp.log(jnp.sum(jnp.exp(logits - m), axis=0, keepdims=True))
    cls_ids = jax.lax.broadcasted_iota(jnp.int32, logits.shape, 0)  # class id per sublane row
    onehot = (cls_ids == labels).astype(jnp.float32)                # (Ncls, T)
    target = jnp.sum(onehot * logits, axis=0, keepdims=True)        # (1, T)
    valid = (labels >= 0).astype(jnp.float32)                       # PyTorch ignore_index (-100)

    # Lane-wide partial sums; the scalar collapse is deferred to the final grid step.
    nll_acc[...] += (lse - target) * valid
    cnt_acc[...] += valid

    @pl.when(jnp.logical_and(n == pl.num_programs(0) - 1, t == pl.num_programs(1) - 1))
    def _():
        loss_ref[...] = (jnp.sum(nll_acc[...], keepdims=True)
                         / jnp.sum(cnt_acc[...], keepdims=True))


def hf_segmentation_forward(x, w, b, labels=None):
    """Equivalent of HFSegmentationModel.forward -> {'loss': ..., 'logits': ...}.

    `net` is a 1x1-conv segmentation head: weight w (num_cls, Cin), bias b (num_cls,).
    x: (N, Cin, H, W), labels: (N, H, W) int (negative = ignored), logits: (N, num_cls, H, W).
    """
    N, Cin, H, W = x.shape
    Ncls = w.shape[0]
    HW = H * W
    T = _pick_tile_hw(HW)
    assert HW % T == 0
    grid = (N, HW // T)

    # Channel-major views: plain reshapes of NCHW, no transpose / extra HBM pass.
    x3 = x.reshape(N, Cin, HW).astype(jnp.float32)
    wf = w.astype(jnp.float32)
    b2 = b.reshape(Ncls, 1).astype(jnp.float32)

    x_spec = pl.BlockSpec((None, Cin, T), lambda n, t: (n, 0, t))
    w_spec = pl.BlockSpec((Ncls, Cin), lambda n, t: (0, 0))
    b_spec = pl.BlockSpec((Ncls, 1), lambda n, t: (0, 0))
    logits_spec = pl.BlockSpec((None, Ncls, T), lambda n, t: (n, 0, t))

    if labels is None:
        logits3 = pl.pallas_call(
            _logits_kernel,
            out_shape=jax.ShapeDtypeStruct((N, Ncls, HW), jnp.float32),
            grid_spec=pltpu.PrefetchScalarGridSpec(
                num_scalar_prefetch=0,
                grid=grid,
                in_specs=[x_spec, w_spec, b_spec],
                out_specs=logits_spec,
            ),
            compiler_params=pltpu.CompilerParams(
                dimension_semantics=("parallel", "parallel")),
        )(x3, wf, b2)
        loss = None
    else:
        labels3 = labels.reshape(N, 1, HW).astype(jnp.int32)
        lab_spec = pl.BlockSpec((None, 1, T), lambda n, t: (n, 0, t))
        loss_spec = pl.BlockSpec((1, 1), lambda n, t: (0, 0))
        logits3, loss2d = pl.pallas_call(
            _fused_kernel,
            out_shape=(jax.ShapeDtypeStruct((N, Ncls, HW), jnp.float32),
                       jax.ShapeDtypeStruct((1, 1), jnp.float32)),
            grid_spec=pltpu.PrefetchScalarGridSpec(
                num_scalar_prefetch=0,
                grid=grid,
                in_specs=[x_spec, w_spec, b_spec, lab_spec],
                out_specs=(logits_spec, loss_spec),
                scratch_shapes=[pltpu.VMEM((1, T), jnp.float32),   # NLL partial sums
                                pltpu.VMEM((1, T), jnp.float32)],  # valid-pixel counts
            ),
            # The loss accumulator is shared across ALL grid steps -> keep both axes "arbitrary"
            # so the scratch is not split across v7x's 2 TensorCores (perf delta vs "parallel" ~0).
            compiler_params=pltpu.CompilerParams(
                dimension_semantics=("arbitrary", "arbitrary")),
        )(x3, wf, b2, labels3)
        loss = loss2d[0, 0]

    logits = logits3.reshape(N, Ncls, H, W)  # free reshape back to NCHW
    return {"loss": loss, "logits": logits}


def _reference_forward(x, w, b, labels):
    # pure-JAX reference for validation
    logits = jnp.einsum("nchw,kc->nkhw", x.astype(jnp.float32), w.astype(jnp.float32))
    logits = logits + b.reshape(1, -1, 1, 1)
    logp = jax.nn.log_softmax(logits, axis=1)
    nll = -jnp.take_along_axis(logp, labels[:, None, :, :], axis=1)[:, 0]
    return logits, jnp.mean(nll)


if __name__ == "__main__":
    N, Cin, H, W, NUM_CLS = 2, 4, 16, 16, 4

    key = jax.random.PRNGKey(0)
    kx, kl, kw, kb = jax.random.split(key, 4)
    x = jax.random.normal(kx, (N, Cin, H, W), dtype=jnp.float32)
    labels = jax.random.randint(kl, (N, H, W), 0, NUM_CLS, dtype=jnp.int32)
    # deterministic "net" parameters (1x1 conv head, PyTorch layout: (out_ch, in_ch))
    w = 0.1 * jax.random.normal(kw, (NUM_CLS, Cin), dtype=jnp.float32)
    b = 0.01 * jax.random.normal(kb, (NUM_CLS,), dtype=jnp.float32)

    # with labels -> {'loss': scalar, 'logits': (N, NUM_CLS, H, W)}
    out = hf_segmentation_forward(x, w, b, labels)
    jax.block_until_ready(out["logits"])
    jax.block_until_ready(out["loss"])

    # without labels -> loss is None (matching the PyTorch wrapper)
    out_nolabel = hf_segmentation_forward(x, w, b, labels=None)
    jax.block_until_ready(out_nolabel["logits"])
    assert out_nolabel["loss"] is None

    # validate against pure-JAX reference
    ref_logits, ref_loss = _reference_forward(x, w, b, labels)
    np.testing.assert_allclose(np.asarray(out["logits"]), np.asarray(ref_logits),
                               rtol=1e-5, atol=1e-5)
    np.testing.assert_allclose(np.asarray(out_nolabel["logits"]), np.asarray(ref_logits),
                               rtol=1e-5, atol=1e-5)
    np.testing.assert_allclose(float(out["loss"]), float(ref_loss), rtol=1e-5, atol=1e-5)

    print("KERNEL_OK")
</pallas_src>

<mosaic_0001>
module attributes {stable_mosaic.version = 11 : i64} {
  func.func @_fused_kernel(%arg0: i32, %arg1: i32, %arg2: memref<1x4x256xf32, #tpu.memory_space<vmem>>, %arg3: memref<4x4xf32, #tpu.memory_space<vmem>>, %arg4: memref<4x1xf32, #tpu.memory_space<vmem>>, %arg5: memref<1x1x256xi32, #tpu.memory_space<vmem>>, %arg6: memref<1x4x256xf32, #tpu.memory_space<vmem>>, %arg7: memref<1x1xf32, #tpu.memory_space<vmem>>, %arg8: memref<1x256xf32, #tpu.memory_space<vmem>>, %arg9: memref<1x256xf32, #tpu.memory_space<vmem>>) attributes {dimension_semantics = [#tpu.dimension_semantics<arbitrary>, #tpu.dimension_semantics<arbitrary>], iteration_bounds = array<i64: 2, 1>, scalar_prefetch = 0 : i64, scratch_operands = 2 : i64, tpu.core_type = #tpu.core_type<tc>, window_params = [{transform_indices = @transform_0, window_bounds = array<i64: 1, 4, 256>}, {pipeline_mode = #tpu.pipeline_mode<synchronous>, transform_indices = @transform_1, window_bounds = array<i64: 4, 4>}, {pipeline_mode = #tpu.pipeline_mode<synchronous>, transform_indices = @transform_2, window_bounds = array<i64: 4, 1>}, {transform_indices = @transform_3, window_bounds = array<i64: 1, 1, 256>}, {transform_indices = @transform_4, window_bounds = array<i64: 1, 4, 256>}, {pipeline_mode = #tpu.pipeline_mode<synchronous>, transform_indices = @transform_5, window_bounds = array<i64: 1, 1>}]} {
    %c0_i32 = arith.constant 0 : i32
    %0 = arith.cmpi eq, %arg0, %c0_i32 : i32
    %c0_i32_0 = arith.constant 0 : i32
    %1 = arith.cmpi eq, %arg1, %c0_i32_0 : i32
    %2 = arith.andi %0, %1 : i1
    %3 = arith.extui %2 : i1 to i32
    %c0_i32_1 = arith.constant 0 : i32
    %4 = arith.cmpi ne, %3, %c0_i32_1 : i32
    scf.if %4 {
      %cst_27 = arith.constant 0.000000e+00 : f32
      %73 = vector.broadcast %cst_27 : f32 to vector<1x256xf32>
      %c0_28 = arith.constant 0 : index
      %c0_29 = arith.constant 0 : index
      %74 = vector.load %arg8[%c0_28, %c0_29] : memref<1x256xf32, #tpu.memory_space<vmem>>, vector<1x256xf32>
      tpu.vector_store %arg8[%c0_28, %c0_29], %73 {strides = array<i32>} : memref<1x256xf32, #tpu.memory_space<vmem>>, vector<1x256xf32>,
      %cst_30 = arith.constant 0.000000e+00 : f32
      %75 = vector.broadcast %cst_30 : f32 to vector<1x256xf32>
      %c0_31 = arith.constant 0 : index
      %c0_32 = arith.constant 0 : index
      %76 = vector.load %arg9[%c0_31, %c0_32] : memref<1x256xf32, #tpu.memory_space<vmem>>, vector<1x256xf32>
      tpu.vector_store %arg9[%c0_31, %c0_32], %75 {strides = array<i32>} : memref<1x256xf32, #tpu.memory_space<vmem>>, vector<1x256xf32>,
    } else {
    }
    %c0 = arith.constant 0 : index
    %c0_2 = arith.constant 0 : index
    %c0_3 = arith.constant 0 : index
    %5 = vector.load %arg2[%c0, %c0_2, %c0_3] : memref<1x4x256xf32, #tpu.memory_space<vmem>>, vector<1x4x256xf32>
    %6 = vector.shape_cast %5 : vector<1x4x256xf32> to vector<4x256xf32>
    %c0_4 = arith.constant 0 : index
    %c0_5 = arith.constant 0 : index
    %7 = vector.load %arg3[%c0_4, %c0_5] : memref<4x4xf32, #tpu.memory_space<vmem>>, vector<4x4xf32>
    %c0_6 = arith.constant 0 : index
    %c0_7 = arith.constant 0 : index
    %8 = vector.load %arg4[%c0_6, %c0_7] : memref<4x1xf32, #tpu.memory_space<vmem>>, vector<4x1xf32>
    %9 = vector.extract_strided_slice %7 {offsets = [0, 0], sizes = [4, 1], strides = [1, 1]} : vector<4x4xf32> to vector<4x1xf32>
    %10 = vector.extract_strided_slice %6 {offsets = [0, 0], sizes = [1, 256], strides = [1, 1]} : vector<4x256xf32> to vector<1x256xf32>
    %11 = vector.broadcast %9 : vector<4x1xf32> to vector<4x256xf32>
    %12 = vector.broadcast %10 : vector<1x256xf32> to vector<4x256xf32>
    %13 = arith.mulf %11, %12 : vector<4x256xf32>
    %14 = vector.broadcast %8 : vector<4x1xf32> to vector<4x256xf32>
    %15 = arith.addf %14, %13 : vector<4x256xf32>
    %16 = vector.extract_strided_slice %7 {offsets = [0, 1], sizes = [4, 1], strides = [1, 1]} : vector<4x4xf32> to vector<4x1xf32>
    %17 = vector.extract_strided_slice %6 {offsets = [1, 0], sizes = [1, 256], strides = [1, 1]} : vector<4x256xf32> to vector<1x256xf32>
    %18 = vector.broadcast %16 : vector<4x1xf32> to vector<4x256xf32>
    %19 = vector.broadcast %17 : vector<1x256xf32> to vector<4x256xf32>
    %20 = arith.mulf %18, %19 : vector<4x256xf32>
    %21 = arith.addf %15, %20 : vector<4x256xf32>
    %22 = vector.extract_strided_slice %7 {offsets = [0, 2], sizes = [4, 1], strides = [1, 1]} : vector<4x4xf32> to vector<4x1xf32>
    %23 = vector.extract_strided_slice %6 {offsets = [2, 0], sizes = [1, 256], strides = [1, 1]} : vector<4x256xf32> to vector<1x256xf32>
    %24 = vector.broadcast %22 : vector<4x1xf32> to vector<4x256xf32>
    %25 = vector.broadcast %23 : vector<1x256xf32> to vector<4x256xf32>
    %26 = arith.mulf %24, %25 : vector<4x256xf32>
    %27 = arith.addf %21, %26 : vector<4x256xf32>
    %28 = vector.extract_strided_slice %7 {offsets = [0, 3], sizes = [4, 1], strides = [1, 1]} : vector<4x4xf32> to vector<4x1xf32>
    %29 = vector.extract_strided_slice %6 {offsets = [3, 0], sizes = [1, 256], strides = [1, 1]} : vector<4x256xf32> to vector<1x256xf32>
    %30 = vector.broadcast %28 : vector<4x1xf32> to vector<4x256xf32>
    %31 = vector.broadcast %29 : vector<1x256xf32> to vector<4x256xf32>
    %32 = arith.mulf %30, %31 : vector<4x256xf32>
    %33 = arith.addf %27, %32 : vector<4x256xf32>
    %c0_8 = arith.constant 0 : index
    %c0_9 = arith.constant 0 : index
    %c0_10 = arith.constant 0 : index
    %34 = vector.load %arg6[%c0_8, %c0_9, %c0_10] : memref<1x4x256xf32, #tpu.memory_space<vmem>>, vector<1x4x256xf32>
    %35 = vector.shape_cast %34 : vector<1x4x256xf32> to vector<4x256xf32>
    %36 = vector.shape_cast %33 : vector<4x256xf32> to vector<1x4x256xf32>
    tpu.vector_store %arg6[%c0_8, %c0_9, %c0_10], %36 {strides = array<i32>} : memref<1x4x256xf32, #tpu.memory_space<vmem>>, vector<1x4x256xf32>,
    %c0_11 = arith.constant 0 : index
    %c0_12 = arith.constant 0 : index
    %c0_13 = arith.constant 0 : index
    %37 = vector.load %arg5[%c0_11, %c0_12, %c0_13] : memref<1x1x256xi32, #tpu.memory_space<vmem>>, vector<1x1x256xi32>
    %38 = vector.shape_cast %37 : vector<1x1x256xi32> to vector<1x256xi32>
    %cst = arith.constant dense<0xFF800000> : vector<256xf32>
    %39 = vector.multi_reduction <maximumf>, %33, %cst [0] : vector<4x256xf32> to vector<256xf32>
    %40 = vector.shape_cast %39 : vector<256xf32> to vector<1x256xf32>
    %41 = vector.broadcast %40 : vector<1x256xf32> to vector<4x256xf32>
    %42 = arith.subf %33, %41 : vector<4x256xf32>
    %43 = math.exp %42 : vector<4x256xf32>
    %cst_14 = arith.constant dense<0.000000e+00> : vector<256xf32>
    %44 = vector.multi_reduction <add>, %43, %cst_14 [0] : vector<4x256xf32> to vector<256xf32>
    %45 = vector.shape_cast %44 : vector<256xf32> to vector<1x256xf32>
    %46 = math.log %45 : vector<1x256xf32>
    %47 = arith.addf %40, %46 : vector<1x256xf32>
    %48 = tpu.iota {dimensions = array<i32: 0>} : vector<4x256xi32>
    %49 = vector.broadcast %38 : vector<1x256xi32> to vector<4x256xi32>
    %50 = arith.cmpi eq, %48, %49 : vector<4x256xi32>
    %51 = arith.extui %50 : vector<4x256xi1> to vector<4x256xi32>
    %52 = arith.sitofp %51 : vector<4x256xi32> to vector<4x256xf32>
    %53 = arith.mulf %52, %33 : vector<4x256xf32>
    %cst_15 = arith.constant dense<0.000000e+00> : vector<256xf32>
    %54 = vector.multi_reduction <add>, %53, %cst_15 [0] : vector<4x256xf32> to vector<256xf32>
    %55 = vector.shape_cast %54 : vector<256xf32> to vector<1x256xf32>
    %c0_i32_16 = arith.constant 0 : i32
    %56 = vector.broadcast %c0_i32_16 : i32 to vector<1x256xi32>
    %57 = arith.cmpi sge, %38, %56 : vector<1x256xi32>
    %58 = arith.extui %57 : vector<1x256xi1> to vector<1x256xi32>
    %59 = arith.sitofp %58 : vector<1x256xi32> to vector<1x256xf32>
    %c0_17 = arith.constant 0 : index
    %c0_18 = arith.constant 0 : index
    %60 = vector.load %arg8[%c0_17, %c0_18] : memref<1x256xf32, #tpu.memory_space<vmem>>, vector<1x256xf32>
    %61 = arith.subf %47, %55 : vector<1x256xf32>
    %62 = arith.mulf %61, %59 : vector<1x256xf32>
    %63 = arith.addf %60, %62 : vector<1x256xf32>
    %c0_19 = arith.constant 0 : index
    %c0_20 = arith.constant 0 : index
    %64 = vector.load %arg8[%c0_19, %c0_20] : memref<1x256xf32, #tpu.memory_space<vmem>>, vector<1x256xf32>
    tpu.vector_store %arg8[%c0_19, %c0_20], %63 {strides = array<i32>} : memref<1x256xf32, #tpu.memory_space<vmem>>, vector<1x256xf32>,
    %c0_21 = arith.constant 0 : index
    %c0_22 = arith.constant 0 : index
    %65 = vector.load %arg9[%c0_21, %c0_22] : memref<1x256xf32, #tpu.memory_space<vmem>>, vector<1x256xf32>
    %66 = arith.addf %65, %59 : vector<1x256xf32>
    %c0_23 = arith.constant 0 : index
    %c0_24 = arith.constant 0 : index
    %67 = vector.load %arg9[%c0_23, %c0_24] : memref<1x256xf32, #tpu.memory_space<vmem>>, vector<1x256xf32>
    tpu.vector_store %arg9[%c0_23, %c0_24], %66 {strides = array<i32>} : memref<1x256xf32, #tpu.memory_space<vmem>>, vector<1x256xf32>,
    %c1_i32 = arith.constant 1 : i32
    %68 = arith.cmpi eq, %arg0, %c1_i32 : i32
    %c0_i32_25 = arith.constant 0 : i32
    %69 = arith.cmpi eq, %arg1, %c0_i32_25 : i32
    %70 = arith.andi %68, %69 : i1
    %71 = arith.extui %70 : i1 to i32
    %c0_i32_26 = arith.constant 0 : i32
    %72 = arith.cmpi ne, %71, %c0_i32_26 : i32
    scf.if %72 {
      %c0_27 = arith.constant 0 : index
      %c0_28 = arith.constant 0 : index
      %73 = vector.load %arg8[%c0_27, %c0_28] : memref<1x256xf32, #tpu.memory_space<vmem>>, vector<1x256xf32>
      %74 = vector.shape_cast %73 : vector<1x256xf32> to vector<1x1x256xf32>
      %cst_29 = arith.constant dense<0.000000e+00> : vector<1xf32>
      %75 = vector.multi_reduction <add>, %74, %cst_29 [1, 2] : vector<1x1x256xf32> to vector<1xf32>
      %76 = vector.shape_cast %75 : vector<1xf32> to vector<1x1x1xf32>
      %77 = vector.extract %76[0, 0, 0] : f32 from vector<1x1x1xf32>
      %78 = vector.broadcast %77 : f32 to vector<1x1xf32>
      %c0_30 = arith.constant 0 : index
      %c0_31 = arith.constant 0 : index
      %79 = vector.load %arg9[%c0_30, %c0_31] : memref<1x256xf32, #tpu.memory_space<vmem>>, vector<1x256xf32>
      %80 = vector.shape_cast %79 : vector<1x256xf32> to vector<1x1x256xf32>
      %cst_32 = arith.constant dense<0.000000e+00> : vector<1xf32>
      %81 = vector.multi_reduction <add>, %80, %cst_32 [1, 2] : vector<1x1x256xf32> to vector<1xf32>
      %82 = vector.shape_cast %81 : vector<1xf32> to vector<1x1x1xf32>
      %83 = vector.extract %82[0, 0, 0] : f32 from vector<1x1x1xf32>
      %84 = vector.broadcast %83 : f32 to vector<1x1xf32>
      %85 = arith.divf %78, %84 : vector<1x1xf32>
      %c0_33 = arith.constant 0 : index
      %c0_34 = arith.constant 0 : index
      %86 = vector.load %arg7[%c0_33, %c0_34] : memref<1x1xf32, #tpu.memory_space<vmem>>, vector<1x1xf32>
      tpu.vector_store %arg7[%c0_33, %c0_34], %85 {strides = array<i32>} : memref<1x1xf32, #tpu.memory_space<vmem>>, vector<1x1xf32>,
    } else {
    }
    return
  }
  func.func @transform_0(%arg0: i32, %arg1: i32) -> (i32, i32, i32) {
    %c0_i32 = arith.constant 0 : i32
    %c0_i32_0 = arith.constant 0 : i32
    return %arg0, %c0_i32, %arg1 : i32, i32, i32
  }
  func.func @transform_1(%arg0: i32, %arg1: i32) -> (i32, i32) {
    %c0_i32 = arith.constant 0 : i32
    %c0_i32_0 = arith.constant 0 : i32
    %c0_i32_1 = arith.constant 0 : i32
    return %c0_i32, %c0_i32_0 : i32, i32
  }
  func.func @transform_2(%arg0: i32, %arg1: i32) -> (i32, i32) {
    %c0_i32 = arith.constant 0 : i32
    %c0_i32_0 = arith.constant 0 : i32
    %c0_i32_1 = arith.constant 0 : i32
    return %c0_i32, %c0_i32_0 : i32, i32
  }
  func.func @transform_3(%arg0: i32, %arg1: i32) -> (i32, i32, i32) {
    %c0_i32 = arith.constant 0 : i32
    %c0_i32_0 = arith.constant 0 : i32
    return %arg0, %c0_i32, %arg1 : i32, i32, i32
  }
  func.func @transform_4(%arg0: i32, %arg1: i32) -> (i32, i32, i32) {
    %c0_i32 = arith.constant 0 : i32
    %c0_i32_0 = arith.constant 0 : i32
    return %arg0, %c0_i32, %arg1 : i32, i32, i32
  }
  func.func @transform_5(%arg0: i32, %arg1: i32) -> (i32, i32) {
    %c0_i32 = arith.constant 0 : i32
    %c0_i32_0 = arith.constant 0 : i32
    %c0_i32_1 = arith.constant 0 : i32
    return %c0_i32, %c0_i32_0 : i32, i32
  }
}

</mosaic_0001>

<llo_original>
// kernel: tpu_custom_call.1
$region0: #{tpu_custom_call.1}
  #allocation0 [shape = 'u32[]', space=smem, size = 0x4, offset = 0x4, fixed_abs, tag = 'smem constant byte address 0x4 - core index']
  #allocation1 [shape = 'u32[144,128]{1,0:T(1,128)}', space=vmem, size = 0x12000, scoped, tag = 'internal scratch']
  #allocation2 [shape = 'f32[1,256]{1,0:T(1,128)}', space=vmem, size = 0x400, scoped, tag = 'scratch operand']
  #allocation3 [shape = 'f32[1,256]{1,0:T(1,128)}', space=vmem, size = 0x400, scoped, tag = 'scratch operand']
  %s0 = inlined_call_operand.hbm [shape: f32[2,4,256], index: 0, kind: input, shape index: {}]
  %s1 = inlined_call_operand.vmem [shape: f32[4,4], index: 1, kind: input, shape index: {}]
  %s2 = inlined_call_operand.vmem [shape: f32[4,1], index: 2, kind: input, shape index: {}]
  %s3 = inlined_call_operand.vmem [shape: s32[2,1,256], index: 3, kind: input, shape index: {}]
  %s4 = inlined_call_operand.hbm [shape: f32[2,4,256], index: 4, kind: output, shape index: {0}]
  %s5 = inlined_call_operand.hbm [shape: f32[1,1], index: 5, kind: output, shape index: {1}]
  %6 = xla_tuple %s4, %s5
  %s7 = sld [smem:[#allocation0]]
  $region69: #{tpu_custom_call.1} parent=0
    _
  %s9 = ssub.s32 1, %s7
  %s10 = scalar_select 0, %s9, %s7
  $region1: #{tpu_custom_call.1} parent=0
    #allocation4 [shape = 'u8[8192]{0}', space=vmem, size = 0x2000, scoped, tag = 'input window, operand 0']
    #allocation5 [shape = 's32[2]{0}', space=sflag, size = 0x8, scoped, tag = 'scoped memory for tpu_custom_call.1']
    #allocation6 [shape = 's32[2]{0}', space=sflag, size = 0x8, scoped, tag = 'scoped memory for tpu_custom_call.1']
    #allocation7 [shape = 'u8[8192]{0}', space=vmem, size = 0x2000, scoped, tag = 'output window, operand 0']
    #allocation8 [shape = 'u8[512]{0}', space=vmem, size = 0x400, scoped, tag = 'output window, operand 1, single buffered']
    #allocation9 [shape = 's32[1]{0}', space=sflag, size = 0x4, scoped, tag = 'scoped memory for tpu_custom_call.1']
    %11 = vsyncpa [#allocation5], 0
    %s12 = scalar_lea.sflag [#allocation5], 1
    %13 = vsyncpa %s12, 0
    %14 = vsyncpa [#allocation6], 0
    %s15 = scalar_lea.sflag [#allocation6], 1
    %16 = vsyncpa %s15, 0
    %17 = vsyncpa [#allocation9], 0
    loop: start=0, step=1, limit=4
    $region2: #{tpu_custom_call.1} parent=1 // loop_pre_header
      _
    $region3: #{tpu_custom_call.1} parent=1 // loop_header
      %s19 = sphi 0, %s23
      %p20 = scmp.ge.s32.totalorder %s19, 4
      %s26 = sphi 0, %s38
      %s27 = sphi 0, %s34
      %s28 = sphi 0, %s26
      %s29 = sphi 0, %s27
      %s30 = sphi 0, %s28
      %s31 = sphi 0, %s29
      %s43 = sphi 0, %s45
      %s46 = sphi 0, %s43
      %s47 = sphi 0, %s46
      %s63 = sphi 0, %s47
      %s67 = sphi 0, %s67
      %s69 = sphi 0, %s67
      %s70 = sphi 0, %s69
      %s84 = sphi 0, %s70
      %s88 = sphi 0, %s88
      %s90 = sphi 0, %s88
      %s91 = sphi 0, %s90
      %s105 = sphi 0, %s91
      %s113 = sphi 0, %s115
      %s116 = sphi 0, %s113
      %s117 = sphi 0, %s116
      %s133 = sphi 0, %s117
      %s141 = sphi 0, %s143
      %s144 = sphi 0, %s141
      %s145 = sphi 0, %s144
      %s161 = sphi 0, %s145
      %s165 = sphi 0, %s165
      %s167 = sphi 0, %s165
      %s168 = sphi 0, %s167
      %s182 = sphi 0, %s168
    $region4: #{tpu_custom_call.1} parent=1 // loop_header_branch
      %22 = sbr.rel (%p20) target = $region8
    $region5: #{tpu_custom_call.1} parent=1 // loop_body
      %s24 = ssub.s32 %s19, 1
      %s25 = ssub.s32 %s19, 2
      %s32 = sadd.s32 1, %s27
      %p33 = scmp.ge.s32.totalorder %s32, 1
      %s34 = scalar_select %p33, 0, %s32
      %s35 = sadd.s32 1, %s26
      %s36 = scalar_select %p33, %s35, %s26
      %p37 = scmp.ge.s32.totalorder %s36, 2
      %s38 = scalar_select %p37, 0, %s36
      %s39 = ssub.s32 %s26, %s38
      %s40 = ssub.s32 %s27, %s34
      %s41 = sor.u32 %s39, %s40
      %p42 = scmp.eq.s32.totalorder %s41, 0
      %s44 = sadd.s32 %s43, 1
      %s45 = scalar_select %p42, %s43, %s44
      %p48 = pneg %p42
      %p49 = scmp.eq.s32.totalorder %s19, 1
      %p50 = por %p48, %p49
      %p51 = scmp.ne.s32.totalorder %s43, %s46
      %p52 = scmp.eq.s32.totalorder %s19, 0
      %p53 = por %p51, %p52
      %p54 = scmp.ne.s32.totalorder %s43, %s46
      %p55 = scmp.eq.s32.totalorder %s24, 1
      %p56 = por %p54, %p55
      %p57 = scmp.ne.s32.totalorder %s46, %s47
      %p58 = scmp.eq.s32.totalorder %s24, 0
      %p59 = por %p57, %p58
      %p60 = scmp.ne.s32.totalorder %s46, %s47
      %p61 = scmp.eq.s32.totalorder %s25, 1
      %p62 = por %p60, %p61
      %p64 = scmp.ne.s32.totalorder %s47, %s63
      %p65 = scmp.eq.s32.totalorder %s25, 0
      %p66 = por %p64, %p65
      %s68 = sadd.s32 %s67, 1
      %p71 = scmp.eq.s32.totalorder %s19, 1
      %p72 = scmp.ne.s32.totalorder %s67, %s69
      %p73 = scmp.eq.s32.totalorder %s19, 0
      %p74 = por %p72, %p73
      %p75 = scmp.ne.s32.totalorder %s67, %s69
      %p76 = scmp.eq.s32.totalorder %s24, 1
      %p77 = por %p75, %p76
      %p78 = scmp.ne.s32.totalorder %s69, %s70
      %p79 = scmp.eq.s32.totalorder %s24, 0
      %p80 = por %p78, %p79
      %p81 = scmp.ne.s32.totalorder %s69, %s70
      %p82 = scmp.eq.s32.totalorder %s25, 1
      %p83 = por %p81, %p82
      %p85 = scmp.ne.s32.totalorder %s70, %s84
      %p86 = scmp.eq.s32.totalorder %s25, 0
      %p87 = por %p85, %p86
      %s89 = sadd.s32 %s88, 1
      %p92 = scmp.eq.s32.totalorder %s19, 1
      %p93 = scmp.ne.s32.totalorder %s88, %s90
      %p94 = scmp.eq.s32.totalorder %s19, 0
      %p95 = por %p93, %p94
      %p96 = scmp.ne.s32.totalorder %s88, %s90
      %p97 = scmp.eq.s32.totalorder %s24, 1
      %p98 = por %p96, %p97
      %p99 = scmp.ne.s32.totalorder %s90, %s91
      %p100 = scmp.eq.s32.totalorder %s24, 0
      %p101 = por %p99, %p100
      %p102 = scmp.ne.s32.totalorder %s90, %s91
      %p103 = scmp.eq.s32.totalorder %s25, 1
      %p104 = por %p102, %p103
      %p106 = scmp.ne.s32.totalorder %s91, %s105
      %p107 = scmp.eq.s32.totalorder %s25, 0
      %p108 = por %p106, %p107
      %s109 = ssub.s32 %s26, %s38
      %s110 = ssub.s32 %s27, %s34
      %s111 = sor.u32 %s109, %s110
      %p112 = scmp.eq.s32.totalorder %s111, 0
      %s114 = sadd.s32 %s113, 1
      %s115 = scalar_select %p112, %s113, %s114
      %p118 = pneg %p112
      %p119 = scmp.eq.s32.totalorder %s19, 1
      %p120 = por %p118, %p119
      %p121 = scmp.ne.s32.totalorder %s113, %s116
      %p122 = scmp.eq.s32.totalorder %s19, 0
      %p123 = por %p121, %p122
      %p124 = scmp.ne.s32.totalorder %s113, %s116
      %p125 = scmp.eq.s32.totalorder %s24, 1
      %p126 = por %p124, %p125
      %p127 = scmp.ne.s32.totalorder %s116, %s117
      %p128 = scmp.eq.s32.totalorder %s24, 0
      %p129 = por %p127, %p128
      %p130 = scmp.ne.s32.totalorder %s116, %s117
      %p131 = scmp.eq.s32.totalorder %s25, 1
      %p132 = por %p130, %p131
      %p134 = scmp.ne.s32.totalorder %s117, %s133
      %p135 = scmp.eq.s32.totalorder %s25, 0
      %p136 = por %p134, %p135
      %s137 = ssub.s32 %s26, %s38
      %s138 = ssub.s32 %s27, %s34
      %s139 = sor.u32 %s137, %s138
      %p140 = scmp.eq.s32.totalorder %s139, 0
      %s142 = sadd.s32 %s141, 1
      %s143 = scalar_select %p140, %s141, %s142
      %p146 = pneg %p140
      %p147 = scmp.eq.s32.totalorder %s19, 1
      %p148 = por %p146, %p147
      %p149 = scmp.ne.s32.totalorder %s141, %s144
      %p150 = scmp.eq.s32.totalorder %s19, 0
      %p151 = por %p149, %p150
      %p152 = scmp.ne.s32.totalorder %s141, %s144
      %p153 = scmp.eq.s32.totalorder %s24, 1
      %p154 = por %p152, %p153
      %p155 = scmp.ne.s32.totalorder %s144, %s145
      %p156 = scmp.eq.s32.totalorder %s24, 0
      %p157 = por %p155, %p156
      %p158 = scmp.ne.s32.totalorder %s144, %s145
      %p159 = scmp.eq.s32.totalorder %s25, 1
      %p160 = por %p158, %p159
      %p162 = scmp.ne.s32.totalorder %s145, %s161
      %p163 = scmp.eq.s32.totalorder %s25, 0
      %p164 = por %p162, %p163
      %s166 = sadd.s32 %s165, 1
      %p169 = scmp.eq.s32.totalorder %s19, 1
      %p170 = scmp.ne.s32.totalorder %s165, %s167
      %p171 = scmp.eq.s32.totalorder %s19, 0
      %p172 = por %p170, %p171
      %p173 = scmp.ne.s32.totalorder %s165, %s167
      %p174 = scmp.eq.s32.totalorder %s24, 1
      %p175 = por %p173, %p174
      %p176 = scmp.ne.s32.totalorder %s167, %s168
      %p177 = scmp.eq.s32.totalorder %s24, 0
      %p178 = por %p176, %p177
      %p179 = scmp.ne.s32.totalorder %s167, %s168
      %p180 = scmp.eq.s32.totalorder %s25, 1
      %p181 = por %p179, %p180
      %p183 = scmp.ne.s32.totalorder %s168, %s182
      %p184 = scmp.eq.s32.totalorder %s25, 0
      %p185 = por %p183, %p184
      %p186 = scmp.le.s32.totalorder 1, %s19
      %p187 = scmp.lt.s32.totalorder %s19, 3
      %p188 = pnand %p186, %p187
      %p189 = pneg %p188
      // Predicated region
      $region9: #{tpu_custom_call.1} parent=5 // pred_check
        _
      $region10: #{tpu_custom_call.1} parent=5 // pred_check_branch
        %191 = sbr.rel (%p188) target = $region12
      $region11: #{tpu_custom_call.1} parent=5 // pred_region
        %s192 = ssub.s32 %s19, 1
        // Predicated region
        $region13: #{tpu_custom_call.1} parent=11 // pred_check
          %p193 = pneg %p80
        $region14: #{tpu_custom_call.1} parent=11 // pred_check_branch
          %195 = sbr.rel (%p193) target = $region16
        $region15: #{tpu_custom_call.1} parent=11 // pred_region
          _
        $region16: #{tpu_custom_call.1} parent=11 // pred_fallthru
          _
        // Predicated region
        $region17: #{tpu_custom_call.1} parent=11 // pred_check
          %p196 = pneg %p101
        $region18: #{tpu_custom_call.1} parent=11 // pred_check_branch
          %198 = sbr.rel (%p196) target = $region20
        $region19: #{tpu_custom_call.1} parent=11 // pred_region
          _
        $region20: #{tpu_custom_call.1} parent=11 // pred_fallthru
          _
      $region12: #{tpu_custom_call.1} parent=5 // pred_fallthru
        _
      %p199 = scmp.lt.s32.totalorder %s19, 2
      // Predicated region
      $region21: #{tpu_custom_call.1} parent=5 // pred_check
        %p200 = pneg %p199
      $region22: #{tpu_custom_call.1} parent=5 // pred_check_branch
        %202 = sbr.rel (%p200) target = $region24
      $region23: #{tpu_custom_call.1} parent=5 // pred_region
        // Predicated region
        $region25: #{tpu_custom_call.1} parent=23 // pred_check
          %p203 = pneg %p53
        $region26: #{tpu_custom_call.1} parent=23 // pred_check_branch
          %205 = sbr.rel (%p203) target = $region28
        $region27: #{tpu_custom_call.1} parent=23 // pred_region
          %s206 = sand.u32 %s43, 1
          %s207 = scalar_lea.sflag [#allocation5], %s206
          %s208 = sand.u32 %s43, 1
          %s209 = smul.addr %s208, 8
          %s210 = scalar_lea.vmem [#allocation4], %s209
          %s211 = smul.u32 2, %s27
          %s213 = ssub.s32 128, 128
          %214 = vsyncadd %s207, %s213
          %s215 = smul.addr %s26, 2
          %s216 = sadd.s32 %s211, %s215
          %s217 = smul.addr %s216, 64
          %s218 = scalar_lea.hbm %s0, %s217
          %s220 = sshll.u32 %s210, 4
          %s221 = int_to_ptr.vmem [resolvable:$true] %s220
          %223 = dma.hbm_to_vmem [thread:$0]  %s218, 128, %s221, %s207
        $region28: #{tpu_custom_call.1} parent=23 // pred_fallthru
          _
        // Predicated region
        $region29: #{tpu_custom_call.1} parent=23 // pred_check
          %p224 = pneg %p123
        $region30: #{tpu_custom_call.1} parent=23 // pred_check_branch
          %226 = sbr.rel (%p224) target = $region32
        $region31: #{tpu_custom_call.1} parent=23 // pred_region
          %s227 = smul.u32 2, %s27
          %p228 = scmp.lt.s32.totalorder %s26, 1
          %s229 = scalar_select %p228, %s26, 1
          %p230 = scmp.lt.s32.totalorder %s227, 1
          %s231 = scalar_select %p230, %s227, 1
          %s232 = smul.addr %s229, 2
          %s233 = sadd.s32 %s231, %s232
          %s234 = scalar_lea.vmem %s3, %s233
          %s235 = smul.u32 2, %s27
        $region32: #{tpu_custom_call.1} parent=23 // pred_fallthru
          _
      $region24: #{tpu_custom_call.1} parent=5 // pred_fallthru
        _
      %p236 = scmp.le.s32.totalorder 1, %s19
      %p237 = scmp.lt.s32.totalorder %s19, 3
      %p238 = pnand %p236, %p237
      %p239 = pneg %p238
      // Predicated region
      $region33: #{tpu_custom_call.1} parent=5 // pred_check
        _
      $region34: #{tpu_custom_call.1} parent=5 // pred_check_branch
        %241 = sbr.rel (%p238) target = $region36
      $region35: #{tpu_custom_call.1} parent=5 // pred_region
        %s242 = ssub.s32 %s19, 1
        %s243 = sand.u32 %s46, 1
        %s244 = scalar_lea.sflag [#allocation5], %s243
        %s245 = sand.u32 %s46, 1
        %s246 = smul.addr %s245, 8
        %s247 = scalar_lea.vmem [#allocation4], %s246
        // Predicated region
        $region37: #{tpu_custom_call.1} parent=35 // pred_check
          %p248 = pneg %p59
        $region38: #{tpu_custom_call.1} parent=35 // pred_check_branch
          %250 = sbr.rel (%p248) target = $region40
        $region39: #{tpu_custom_call.1} parent=35 // pred_region
          %251 = dma.done %s244, 128
        $region40: #{tpu_custom_call.1} parent=35 // pred_fallthru
          _
        %s252 = sand.u32 %s46, 1
        %s253 = scalar_lea.sflag [#allocation5], %s252
        %s254 = sand.u32 %s46, 1
        %s255 = smul.addr %s254, 8
        %s256 = scalar_lea.vmem [#allocation4], %s255
        %p257 = pneg %p59
        %p258 = pneg %p56
        %p259 = pneg %p80
        %p260 = pneg %p77
        %p261 = pneg %p101
        %p262 = pneg %p98
        %s263 = smul.u32 2, %s29
        %p264 = scmp.lt.s32.totalorder %s28, 1
        %s265 = scalar_select %p264, %s28, 1
        %p266 = scmp.lt.s32.totalorder %s263, 1
        %s267 = scalar_select %p266, %s263, 1
        %s268 = smul.addr %s265, 2
        %s269 = sadd.s32 %s267, %s268
        %s270 = scalar_lea.vmem %s3, %s269
        %p271 = pneg %p129
        %p272 = pneg %p126
        %p273 = pneg %p157
        %p274 = pneg %p154
        %s275 = sand.u32 %s144, 1
        %s276 = scalar_lea.sflag [#allocation6], %s275
        %s277 = sand.u32 %s144, 1
        %s278 = smul.addr %s277, 8
        %s279 = scalar_lea.vmem [#allocation7], %s278
        %p280 = pneg %p178
        %p281 = pneg %p175
        %s282 = smul.u32 2, %s29
        %s283 = smul.u32 2, %s29
        %p284 = scmp.lt.s32.totalorder %s28, 1
        %s285 = scalar_select %p284, %s28, 1
        %p286 = scmp.lt.s32.totalorder %s283, 1
        %s287 = scalar_select %p286, %s283, 1
        %s288 = smul.addr %s285, 2
        %s289 = sadd.s32 %s287, %s288
        %s290 = scalar_lea.vmem %s3, %s289
        %s291 = smul.u32 2, %s29
        %s292 = smul.u32 2, %s29
        %p293 = scmp.eq.s32.totalorder %s28, 0
        %p294 = scmp.eq.s32.totalorder %s29, 0
        %p295 = pnand %p293, %p294
        %p296 = pneg %p295
        // Predicated region
        $region41: #{tpu_custom_call.1} parent=35 // pred_check
          _
        $region42: #{tpu_custom_call.1} parent=35 // pred_check_branch
          %298 = sbr.rel (%p295) target = $region44
        $region43: #{tpu_custom_call.1} parent=35 // pred_region
          %v299 = vlaneseq
          %vm300 = vcmp.ge.s32.totalorder %v299, 0
          %vm301 = vcmp.lt.s32.totalorder %v299, 256
          %vm302 = vmand %vm300, %vm301
          %303 = vst.msk [vmem:[#allocation2] sm:$0x3] %vm302, 0.0
          %304 = vst.msk [vmem:[#allocation3] sm:$0x3] %vm302, 0.0
        $region44: #{tpu_custom_call.1} parent=35 // pred_fallthru
          _
        %v305 = vld [vmem:[%s247] sm:$0xff]
        %v306 = vld [vmem:[%s1] sm:$0xf]
        %v307 = vld [vmem:[%s2] sm:$0xf]
        %309 = vset.pattern.permute.xlu0 0
        %310 = vperm.xlu0 %309, %v306
        %v311 = vpop.permute.xlu0 %310
        %v314 = vlaneseq
        %v315 = vshrl.u32 %v314, 7
        %v316 = vsub.s32 0, %v315
        %v317 = vrot.slane %v305, %v316
        %v318 = vlaneseq
        %v319 = vshrl.u32 %v318, 7
        %v320 = vsub.s32 4, %v319
        %v321 = vrot.slane %v305, %v320
        %v324 = vlaneseq
        %v325 = vshrl.u32 %v324, 7
        %v326 = vsub.s32 0, %v325
        %v327 = vrot.slane %v317, %v326
        %v328 = vlaneseq
        %v329 = vshrl.u32 %v328, 7
        %v330 = vsub.s32 0, %v329
        %v331 = vrot.slane %v321, %v330
        %v332 = vmul.f32 %v311, %v327
        %v333 = vmul.f32 %v311, %v331
        %335 = vset.pattern.permute.xlu0 0
        %336 = vperm.xlu0 %335, %v307
        %v337 = vpop.permute.xlu0 %336
        %v339 = vadd.f32 %v337, %v332
        %v340 = vadd.f32 %v337, %v333
        %341 = vset.pattern.permute.xlu0 1
        %342 = vperm.xlu0 %341, %v306
        %v343 = vpop.permute.xlu0 %342
        %v345 = vlaneseq
        %v346 = vshrl.u32 %v345, 7
        %v347 = vsub.s32 1, %v346
        %v348 = vrot.slane %v305, %v347
        %v349 = vlaneseq
        %v350 = vshrl.u32 %v349, 7
        %v351 = vsub.s32 5, %v350
        %v352 = vrot.slane %v305, %v351
        %v355 = vlaneseq
        %v356 = vshrl.u32 %v355, 7
        %v357 = vsub.s32 1, %v356
        %v358 = vrot.slane %v348, %v357
        %v359 = vlaneseq
        %v360 = vshrl.u32 %v359, 7
        %v361 = vsub.s32 1, %v360
        %v362 = vrot.slane %v352, %v361
        %v363 = vmul.f32 %v343, %v358
        %v364 = vmul.f32 %v343, %v362
        %v365 = vadd.f32 %v339, %v363
        %v366 = vadd.f32 %v340, %v364
        %367 = vset.pattern.permute.xlu0 2
        %368 = vperm.xlu0 %367, %v306
        %v369 = vpop.permute.xlu0 %368
        %v371 = vlaneseq
        %v372 = vshrl.u32 %v371, 7
        %v373 = vsub.s32 2, %v372
        %v374 = vrot.slane %v305, %v373
        %v375 = vlaneseq
        %v376 = vshrl.u32 %v375, 7
        %v377 = vsub.s32 6, %v376
        %v378 = vrot.slane %v305, %v377
        %v381 = vlaneseq
        %v382 = vshrl.u32 %v381, 7
        %v383 = vsub.s32 2, %v382
        %v384 = vrot.slane %v374, %v383
        %v385 = vlaneseq
        %v386 = vshrl.u32 %v385, 7
        %v387 = vsub.s32 2, %v386
        %v388 = vrot.slane %v378, %v387
        %v389 = vmul.f32 %v369, %v384
        %v390 = vmul.f32 %v369, %v388
        %v391 = vadd.f32 %v365, %v389
        %v392 = vadd.f32 %v366, %v390
        %393 = vset.pattern.permute.xlu0 3
        %394 = vperm.xlu0 %393, %v306
        %v395 = vpop.permute.xlu0 %394
        %v397 = vlaneseq
        %v398 = vshrl.u32 %v397, 7
        %v399 = vsub.s32 3, %v398
        %v400 = vrot.slane %v305, %v399
        %v401 = vlaneseq
        %v402 = vshrl.u32 %v401, 7
        %v403 = vsub.s32 7, %v402
        %v404 = vrot.slane %v305, %v403
        %v407 = vlaneseq
        %v408 = vshrl.u32 %v407, 7
        %v409 = vsub.s32 3, %v408
        %v410 = vrot.slane %v400, %v409
        %v411 = vlaneseq
        %v412 = vshrl.u32 %v411, 7
        %v413 = vsub.s32 3, %v412
        %v414 = vrot.slane %v404, %v413
        %v415 = vmul.f32 %v395, %v410
        %v416 = vmul.f32 %v395, %v414
        %v417 = vadd.f32 %v391, %v415
        %v418 = vadd.f32 %v392, %v416
        %v421 = vcombine.low %v417, %v418
        %423 = vst [vmem:[%s279] sm:$0xff] %v421
        %v424 = vld [vmem:[%s290] sm:$0x3]
        %vm425 = vcmask 1043456
        %v426 = vsel %vm425, %v417, -inf
        %v427 = vrot.slane %v426, 4
        %v428 = vmax.f32 %v426, %v427
        %v429 = vrot.slane %v428, 2
        %v430 = vmax.f32 %v428, %v429
        %v431 = vrot.slane %v430, 1
        %v432 = vmax.f32 %v430, %v431
        %v433 = vsel %vm425, %v418, -inf
        %v434 = vrot.slane %v433, 4
        %v435 = vmax.f32 %v433, %v434
        %v436 = vrot.slane %v435, 2
        %v437 = vmax.f32 %v435, %v436
        %v438 = vrot.slane %v437, 1
        %v439 = vmax.f32 %v437, %v438
        %v440 = vsub.f32 %v417, %v432
        %v441 = vsub.f32 %v418, %v439
        %v442 = vmul.f32 %v440, 1.442695
        %v443 = vpow.pop %v442
        %v444 = vmul.f32 %v441, 1.442695
        %v445 = vpow.pop %v444
        %v446 = vsel %vm425, %v443, 0.0
        %v447 = vrot.slane %v446, 4
        %v448 = vadd.f32 %v446, %v447
        %v449 = vrot.slane %v448, 2
        %v450 = vadd.f32 %v448, %v449
        %v451 = vrot.slane %v450, 1
        %v452 = vadd.f32 %v450, %v451
        %v453 = vsel %vm425, %v445, 0.0
        %v454 = vrot.slane %v453, 4
        %v455 = vadd.f32 %v453, %v454
        %v456 = vrot.slane %v455, 2
        %v457 = vadd.f32 %v455, %v456
        %v458 = vrot.slane %v457, 1
        %v459 = vadd.f32 %v457, %v458
        %v460 = vlog2.pop %v452
        %v461 = vmul.f32 %v460, 0.6931472
        %v462 = vlog2.pop %v459
        %v463 = vmul.f32 %v462, 0.6931472
        %v464 = vadd.f32 %v432, %v461
        %v465 = vadd.f32 %v439, %v463
        %v466 = vlaneseq
        %v467 = vshrl.u32 %v466, 7
        %v468 = vlaneseq
        %v469 = vshrl.u32 %v468, 7
        %v470 = vsub.s32 0, %v469
        %v471 = vrot.slane %v424, %v470
        %v472 = vlaneseq
        %v473 = vshrl.u32 %v472, 7
        %v474 = vsub.s32 1, %v473
        %v475 = vrot.slane %v424, %v474
        %vm476 = vcmp.eq.s32.totalorder %v467, %v471
        %vm477 = vcmp.eq.s32.totalorder %v467, %v475
        %v478 = vsel %vm476, 1, 0
        %v479 = vsel %vm477, 1, 0
        %v480 = vcvt.s32.f32 %v478
        %v481 = vcvt.s32.f32 %v479
        %v482 = vmul.f32 %v480, %v417
        %v483 = vmul.f32 %v481, %v418
        %v484 = vsel %vm425, %v482, 0.0
        %v485 = vrot.slane %v484, 4
        %v486 = vadd.f32 %v484, %v485
        %v487 = vrot.slane %v486, 2
        %v488 = vadd.f32 %v486, %v487
        %v489 = vrot.slane %v488, 1
        %v490 = vadd.f32 %v488, %v489
        %v491 = vsel %vm425, %v483, 0.0
        %v492 = vrot.slane %v491, 4
        %v493 = vadd.f32 %v491, %v492
        %v494 = vrot.slane %v493, 2
        %v495 = vadd.f32 %v493, %v494
        %v496 = vrot.slane %v495, 1
        %v497 = vadd.f32 %v495, %v496
        %vm498 = vcmp.ge.s32.totalorder %v424, 0
        %v499 = vsel %vm498, 1, 0
        %v500 = vcvt.s32.f32 %v499
        %v501 = vld [vmem:[#allocation2] sm:$0x3]
        %v502 = vsub.f32 %v464, %v490
        %v503 = vsub.f32 %v465, %v497
        %v505 = vlaneseq
        %v506 = vshrl.u32 %v505, 7
        %v507 = vsub.s32 0, %v506
        %v508 = vrot.slane %v500, %v507
        %v509 = vlaneseq
        %v510 = vshrl.u32 %v509, 7
        %v511 = vsub.s32 1, %v510
        %v512 = vrot.slane %v500, %v511
        %v515 = vmul.f32 %v502, %v508
        %v516 = vmul.f32 %v503, %v512
        %v519 = vcombine.low %v515, %v516
        %v521 = vunpack.c.l.s4 1966171168
        %v522 = vunpack.c.0.s8 %v521
        %v523 = vlaneseq
        %v524 = vshrl.u32 %v523, 7
        %v525 = vsub.s32 %v522, %v524
        %v526 = vrot.slane %v519, %v525
        %v528 = vunpack.c.l.s4 1966171168
        %v529 = vunpack.c.0.s8 %v528
        %v530 = vlaneseq
        %v531 = vshrl.u32 %v530, 7
        %v532 = vsub.s32 %v529, %v531
        %v533 = vrot.slane %v526, %v532
        %v535 = vadd.f32 %v501, %v533
        %v536 = vlaneseq
        %vm537 = vcmp.ge.s32.totalorder %v536, 0
        %vm538 = vcmp.lt.s32.totalorder %v536, 256
        %vm539 = vmand %vm537, %vm538
        %540 = vst.msk [vmem:[#allocation2] sm:$0x3] %vm539, %v535
        %v541 = vld [vmem:[#allocation3] sm:$0x3]
        %v542 = vadd.f32 %v541, %v500
        %543 = vst.msk [vmem:[#allocation3] sm:$0x3] %vm539, %v542
        %p544 = scmp.eq.s32.totalorder %s28, 1
        %p545 = pnand %p544, %p294
        %p546 = pneg %p545
        // Predicated region
        $region45: #{tpu_custom_call.1} parent=35 // pred_check
          _
        $region46: #{tpu_custom_call.1} parent=35 // pred_check_branch
          %548 = sbr.rel (%p545) target = $region48
        $region47: #{tpu_custom_call.1} parent=35 // pred_region
          %v549 = vld [vmem:[#allocation2] sm:$0x3]
          %v551 = vlaneseq
          %v552 = vshrl.u32 %v551, 7
          %v553 = vsub.s32 0, %v552
          %v554 = vrot.slane %v549, %v553
          %v555 = vlaneseq
          %v556 = vshrl.u32 %v555, 7
          %v557 = vsub.s32 1, %v556
          %v558 = vrot.slane %v549, %v557
          %vm561 = vcmask 1040384
          %v562 = vsel %vm561, %v554, 0.0
          %v563 = vsel %vm561, %v558, 0.0
          %v564 = vadd.f32 %v562, %v563
          %565 = vadd.xlane.f32.xlu0 %v564
          %v566 = vpop.xlane.xlu0 %565
          %v567 = vrot.slane %v566, 4
          %v568 = vadd.f32 %v566, %v567
          %v569 = vrot.slane %v568, 2
          %v570 = vadd.f32 %v568, %v569
          %v571 = vrot.slane %v570, 1
          %v572 = vadd.f32 %v570, %v571
          %s573 = vtos %v572
          %v574 = vstv %s573
          %v575 = vld [vmem:[#allocation3] sm:$0x3]
          %v577 = vlaneseq
          %v578 = vshrl.u32 %v577, 7
          %v579 = vsub.s32 0, %v578
          %v580 = vrot.slane %v575, %v579
          %v581 = vlaneseq
          %v582 = vshrl.u32 %v581, 7
          %v583 = vsub.s32 1, %v582
          %v584 = vrot.slane %v575, %v583
          %v587 = vsel %vm561, %v580, 0.0
          %v588 = vsel %vm561, %v584, 0.0
          %v589 = vadd.f32 %v587, %v588
          %590 = vadd.xlane.f32.xlu0 %v589
          %v591 = vpop.xlane.xlu0 %590
          %v592 = vrot.slane %v591, 4
          %v593 = vadd.f32 %v591, %v592
          %v594 = vrot.slane %v593, 2
          %v595 = vadd.f32 %v593, %v594
          %v596 = vrot.slane %v595, 1
          %v597 = vadd.f32 %v595, %v596
          %s598 = vtos %v597
          %v599 = vstv %s598
          %v600 = vrcp.pop %v599
          %v601 = vmul.f32 %v574, %v600
          %vm602 = vcmask 0
          %603 = vst.msk [vmem:[#allocation8] sm:$0x1] %vm602, %v601
        $region48: #{tpu_custom_call.1} parent=35 // pred_fallthru
          _
        %s604 = sand.u32 %s144, 1
        %s605 = scalar_lea.sflag [#allocation6], %s604
        %s606 = sand.u32 %s144, 1
        %s607 = smul.addr %s606, 8
        %s608 = scalar_lea.vmem [#allocation7], %s607
        // Predicated region
        $region49: #{tpu_custom_call.1} parent=35 // pred_check
          %p609 = pneg %p154
        $region50: #{tpu_custom_call.1} parent=35 // pred_check_branch
          %611 = sbr.rel (%p609) target = $region52
        $region51: #{tpu_custom_call.1} parent=35 // pred_region
          %s612 = smul.u32 2, %s29
          %s614 = ssub.s32 128, 128
          %615 = vsyncadd %s605, %s614
          %s616 = smul.addr %s28, 2
          %s617 = sadd.s32 %s612, %s616
          %s618 = smul.addr %s617, 64
          %s619 = scalar_lea.hbm %s4, %s618
          %s621 = sshll.u32 %s608, 4
          %s622 = int_to_ptr.vmem [resolvable:$true] %s621
          %624 = dma.vmem_to_hbm [thread:$0]  %s622, 128, %s619, %s605
        $region52: #{tpu_custom_call.1} parent=35 // pred_fallthru
          _
        // Predicated region
        $region53: #{tpu_custom_call.1} parent=35 // pred_check
          %p625 = pneg %p175
        $region54: #{tpu_custom_call.1} parent=35 // pred_check_branch
          %627 = sbr.rel (%p625) target = $region56
        $region55: #{tpu_custom_call.1} parent=35 // pred_region
          %s629 = ssub.s32 16, 16
          %630 = vsyncadd [#allocation9], %s629
          %s632 = sshll.u32 [#allocation8], 4
          %s633 = int_to_ptr.vmem [resolvable:$true] %s632
          %635 = dma.vmem_to_hbm [thread:$0]  %s633, 16, %s5, [#allocation9]
        $region56: #{tpu_custom_call.1} parent=35 // pred_fallthru
          _
        // Predicated region
        $region57: #{tpu_custom_call.1} parent=35 // pred_check
          %p636 = pneg %p175
        $region58: #{tpu_custom_call.1} parent=35 // pred_check_branch
          %638 = sbr.rel (%p636) target = $region60
        $region59: #{tpu_custom_call.1} parent=35 // pred_region
          %639 = dma.done [#allocation9], 16
        $region60: #{tpu_custom_call.1} parent=35 // pred_fallthru
          _
      $region36: #{tpu_custom_call.1} parent=5 // pred_fallthru
        _
      %p640 = scmp.le.s32.totalorder 2, %s19
      // Predicated region
      $region61: #{tpu_custom_call.1} parent=5 // pred_check
        %p641 = pneg %p640
      $region62: #{tpu_custom_call.1} parent=5 // pred_check_branch
        %643 = sbr.rel (%p641) target = $region64
      $region63: #{tpu_custom_call.1} parent=5 // pred_region
        %s644 = ssub.s32 %s19, 2
        // Predicated region
        $region65: #{tpu_custom_call.1} parent=63 // pred_check
          %p645 = pneg %p160
        $region66: #{tpu_custom_call.1} parent=63 // pred_check_branch
          %647 = sbr.rel (%p645) target = $region68
        $region67: #{tpu_custom_call.1} parent=63 // pred_region
          %s648 = sand.u32 %s145, 1
          %s649 = scalar_lea.sflag [#allocation6], %s648
          %s650 = sand.u32 %s145, 1
          %s651 = smul.addr %s650, 8
          %s652 = scalar_lea.vmem [#allocation7], %s651
          %653 = dma.done %s649, 128
        $region68: #{tpu_custom_call.1} parent=63 // pred_fallthru
          _
      $region64: #{tpu_custom_call.1} parent=5 // pred_fallthru
        _
    $region6: #{tpu_custom_call.1} parent=1 // loop_footer
      %s23 = sadd.s32 1, %s19
    $region7: #{tpu_custom_call.1} parent=1 // loop_footer_branch
      %18 = sbr.rel target = $region3
    $region8: #{tpu_custom_call.1} parent=1 // loop_exit
      _
    %654 = vsyncpa [#allocation5], 1
    %s655 = scalar_lea.sflag [#allocation5], 1
    %656 = vsyncpa %s655, 1
    %657 = vsyncpa [#allocation6], 1
    %s658 = scalar_lea.sflag [#allocation6], 1
    %659 = vsyncpa %s658, 1
    %660 = vsyncpa [#allocation9], 1

</llo_original>
